<compile_context>
chip_gen: v7x
topology: tpu7x:2x2x1
jax: 0.10.0
libtpu: 0.0.40
codegen_flags: <defaults>
</compile_context>

<pallas_src>
import functools
import math

import jax
import jax.numpy as jnp
from jax.experimental import pallas as pl
from jax.experimental.pallas import tpu as pltpu


# -----------------------------------------------------------------------------
# Fused forward kernel: GST -> encoder -> reparameterise -> decoder
# -----------------------------------------------------------------------------
def _cvae_fused_kernel(
    x_ref, eps_ref,
    xw_ref, xb_ref,          # fused  x @ [gst_ref_w | enc_w1_x]  (+ biases)
    gk_ref, gkt_ref,         # tanh(tokens) and its transpose (precomputed)
    lw_ref, lb_ref,          # fused  l @ [enc_w1_l | dec_w1_l]  (+ [0 | dec_b1])
    hw_ref, hb_ref,          # fused  (mu | logvar) head, 128 lanes
    dzw_ref,                 # decoder z -> hidden
    dw2_ref, db2_ref,        # decoder hidden -> x_logvar
    xlv_ref, mulv_ref,
    *, style_dim, hidden, z_dim, inv_sqrt_e,
):
    f32, bf16 = jnp.float32, jnp.bfloat16
    x = x_ref[...]                                    # [tm, X] bf16

    # --- fused shared-LHS matmul: GST ref-encoder + encoder x-branch ----------
    xres = jnp.dot(x, xw_ref[...], preferred_element_type=f32) + xb_ref[...]
    q = jnp.tanh(xres[:, :style_dim])                 # [tm, S]
    hx = xres[:, style_dim:style_dim + hidden]        # [tm, H] (enc_b1 included)

    # --- style-token attention (keys = tanh(tokens)) ---------------------------
    scores = jnp.dot(q.astype(bf16), gkt_ref[...], preferred_element_type=f32)
    # q and keys are tanh-bounded -> |scores| <= sqrt(E); exp cannot overflow in
    # f32, so the usual max-subtraction is skipped.  (Restore it if the GST
    # sub-module ever produces unbounded scores.)
    p = jnp.exp(scores * inv_sqrt_e)                  # [tm, T]
    p = p * pl.reciprocal(jnp.sum(p, axis=-1, keepdims=True), approx=True)
    l = jnp.dot(p.astype(bf16), gk_ref[...], preferred_element_type=f32)
    l_bf = l.astype(bf16)                             # [tm, S]  (squeeze: no-op)

    # --- fused shared-LHS matmul: encoder l-branch + decoder l-branch ---------
    lres = jnp.dot(l_bf, lw_ref[...], preferred_element_type=f32) + lb_ref[...]
    hl_enc = lres[:, :hidden]                         # [tm, H]
    hl_dec = lres[:, hidden:2 * hidden]               # [tm, H] (dec_b1 included)

    # --- encoder hidden + fused (mu | logvar) head -----------------------------
    h = jnp.maximum(hx + hl_enc, 0.0)                 # [tm, H]
    mulv = jnp.dot(h.astype(bf16), hw_ref[...],
                   preferred_element_type=f32) + hb_ref[...]      # [tm, 128]
    mulv_ref[...] = mulv                              # lane-dense store

    z_mu = mulv[:, :z_dim]
    z_lv = mulv[:, z_dim:2 * z_dim]

    # --- reparameterisation: z = mu + exp(logvar / 2) * eps --------------------
    z = z_mu + jnp.exp(z_lv * 0.5) * eps_ref[...]     # [tm, Z]

    # --- decoder ----------------------------------------------------------------
    hd = jnp.dot(z.astype(bf16), dzw_ref[...], preferred_element_type=f32)
    hd = jnp.tanh(hd + hl_dec)                        # [tm, H]
    xlv_ref[...] = (jnp.dot(hd.astype(bf16), dw2_ref[...],
                            preferred_element_type=f32) + db2_ref[...])


# -----------------------------------------------------------------------------
# Parameter construction (deterministic, PyTorch-default-like uniform init)
# Weights are packed into the fused bf16 layouts the kernel consumes.
# -----------------------------------------------------------------------------
def init_params(key, x_dim, style_dim, n_tokens, hidden, z_dim):
    keys = jax.random.split(key, 14)

    def lin(kw, kb, fan_in, fan_out):
        bound = 1.0 / math.sqrt(fan_in)
        w = jax.random.uniform(kw, (fan_in, fan_out), jnp.float32, -bound, bound)
        b = jax.random.uniform(kb, (1, fan_out), jnp.float32, -bound, bound)
        return w, b

    # GST: reference encoder + style tokens (tanh precomputed; tokens constant)
    grw, grb = lin(keys[0], keys[1], x_dim, style_dim)
    tokens = jax.random.normal(keys[2], (n_tokens, style_dim), jnp.float32) * 0.5
    gst_keys = jnp.tanh(tokens)                       # [T, S]

    # Encoder layer 1, split so concat([x, l]) becomes x@Wx + l@Wl
    w1, b1 = lin(keys[3], keys[4], x_dim + style_dim, hidden)
    ew1x, ew1l = w1[:x_dim], w1[x_dim:]

    # mu / logvar heads
    wmu, bmu = lin(keys[5], keys[6], hidden, z_dim)
    wlv, blv = lin(keys[7], keys[8], hidden, z_dim)

    # Decoder layer 1, split so concat([z, l]) becomes z@Wz + l@Wl
    wd1, bd1 = lin(keys[9], keys[10], z_dim + style_dim, hidden)
    dw1z, dw1l = wd1[:z_dim], wd1[z_dim:]
    dw2, db2 = lin(keys[11], keys[12], hidden, x_dim)

    bf16 = jnp.bfloat16
    # fused x-weight: lanes [0,S) = gst_ref_w, [S,S+H) = enc_w1_x, padded to 128
    xw_pad = max(128, ((style_dim + hidden + 127) // 128) * 128)
    xw = jnp.zeros((x_dim, xw_pad), jnp.float32)
    xw = xw.at[:, :style_dim].set(grw).at[:, style_dim:style_dim + hidden].set(ew1x)
    xb = jnp.zeros((1, xw_pad), jnp.float32)
    xb = xb.at[:, :style_dim].set(grb).at[:, style_dim:style_dim + hidden].set(b1)

    # fused l-weight: lanes [0,H) = enc_w1_l, [H,2H) = dec_w1_l; bias [0 | dec_b1]
    lw = jnp.concatenate([ew1l, dw1l], axis=1)                    # [S, 2H]
    lb = jnp.concatenate([jnp.zeros_like(bd1), bd1], axis=1)      # [1, 2H]

    # fused (mu | logvar) head padded to 128 lanes (lane-dense output)
    head_pad = max(128, ((2 * z_dim + 127) // 128) * 128)
    hw = jnp.zeros((hidden, head_pad), jnp.float32)
    hw = hw.at[:, :z_dim].set(wmu).at[:, z_dim:2 * z_dim].set(wlv)
    hb = jnp.zeros((1, head_pad), jnp.float32)
    hb = hb.at[:, :z_dim].set(bmu).at[:, z_dim:2 * z_dim].set(blv)

    return {
        "xw": xw.astype(bf16), "xb": xb,
        "gst_keys": gst_keys.astype(bf16), "gst_keys_t": gst_keys.T.astype(bf16),
        "lw": lw.astype(bf16), "lb": lb,
        "enc_head_w": hw.astype(bf16), "enc_head_b": hb,
        "dec_w1_z": dw1z.astype(bf16),
        "dec_w2": dw2.astype(bf16), "dec_b2": db2,
    }


# -----------------------------------------------------------------------------
# Batch-tile selection: size to the MXU / per-step overhead, not to VMEM
# -----------------------------------------------------------------------------
def _choose_tile(b):
    if b >= 512:
        return 256                        # full MXU-height tiles (v6e/v7x), >=2 steps
    if b >= 32:
        return ((b + 31) // 32) * 16      # ceil(b/2) rounded to 16 -> 2 parallel
                                          # grid steps (both v7x TensorCores busy)
    return ((b + 7) // 8) * 8             # tiny batch: one step, tile == full batch


# -----------------------------------------------------------------------------
# CVAE.forward wrapper (single pallas_call)
# -----------------------------------------------------------------------------
def cvae_forward(params, x, eps, *, tm=None):
    b = x.shape[0]
    x_flat = x.reshape(b, -1).astype(jnp.bfloat16)    # bf16 input: MXU LHS anyway
    eps = eps.astype(jnp.float32)
    x_dim = x_flat.shape[1]
    z_dim = eps.shape[1]
    style_dim = params["gst_keys"].shape[1]
    hidden = params["dec_w2"].shape[0]
    head_pad = params["enc_head_w"].shape[1]
    xw_pad = params["xw"].shape[1]

    if tm is None:
        tm = _choose_tile(b)
    b_pad = pl.cdiv(b, tm) * tm
    if b_pad != b:                                    # pad only the remainder rows
        x_p = jnp.pad(x_flat, ((0, b_pad - b), (0, 0)))
        eps_p = jnp.pad(eps, ((0, b_pad - b), (0, 0)))
    else:                                             # no redundant zero+copy
        x_p, eps_p = x_flat, eps

    row = lambda shape: pl.BlockSpec(shape, lambda i: (i, 0))    # batch-tiled
    rep = lambda arr: pl.BlockSpec(arr.shape, lambda i: (0, 0))  # replicated

    weights = (params["xw"], params["xb"],
               params["gst_keys"], params["gst_keys_t"],
               params["lw"], params["lb"],
               params["enc_head_w"], params["enc_head_b"],
               params["dec_w1_z"],
               params["dec_w2"], params["dec_b2"])

    xlv_p, mulv_p = pl.pallas_call(
        functools.partial(_cvae_fused_kernel,
                          style_dim=style_dim, hidden=hidden, z_dim=z_dim,
                          inv_sqrt_e=1.0 / math.sqrt(style_dim)),
        out_shape=(jax.ShapeDtypeStruct((b_pad, x_dim), jnp.float32),
                   jax.ShapeDtypeStruct((b_pad, head_pad), jnp.float32)),
        grid_spec=pltpu.PrefetchScalarGridSpec(
            num_scalar_prefetch=0,
            grid=(b_pad // tm,),
            in_specs=[row((tm, x_dim)), row((tm, z_dim))]
                     + [rep(w) for w in weights],
            out_specs=[row((tm, x_dim)), row((tm, head_pad))],
        ),
        compiler_params=pltpu.CompilerParams(
            dimension_semantics=("parallel",)),
        _ = None,
    ) if False else pl.pallas_call(
        functools.partial(_cvae_fused_kernel,
                          style_dim=style_dim, hidden=hidden, z_dim=z_dim,
                          inv_sqrt_e=1.0 / math.sqrt(style_dim)),
        out_shape=(jax.ShapeDtypeStruct((b_pad, x_dim), jnp.float32),
                   jax.ShapeDtypeStruct((b_pad, head_pad), jnp.float32)),
        grid_spec=pltpu.PrefetchScalarGridSpec(
            num_scalar_prefetch=0,
            grid=(b_pad // tm,),
            in_specs=[row((tm, x_dim)), row((tm, z_dim))]
                     + [rep(w) for w in weights],
            out_specs=[row((tm, x_dim)), row((tm, head_pad))],
        ),
        compiler_params=pltpu.CompilerParams(
            dimension_semantics=("parallel",)),
    )(x_p, eps_p, *weights)

    x_logvar = xlv_p[:b].reshape(x.shape)
    z_mu = mulv_p[:b, :z_dim]
    z_logvar = mulv_p[:b, z_dim:2 * z_dim]
    return x_logvar, z_mu, z_logvar


# -----------------------------------------------------------------------------
# Pure-JAX f32 reference (same packed weights, f32 math) for sanity check
# -----------------------------------------------------------------------------
def cvae_forward_ref(params, x, eps):
    b = x.shape[0]
    # match the kernel's bf16 input cast so the comparison isolates kernel math
    x_flat = x.reshape(b, -1).astype(jnp.bfloat16).astype(jnp.float32)
    z_dim = eps.shape[1]
    style_dim = params["gst_keys"].shape[1]
    hidden = params["dec_w2"].shape[0]
    f32 = jnp.float32

    xw, xb = params["xw"].astype(f32), params["xb"]
    xres = x_flat @ xw + xb
    q = jnp.tanh(xres[:, :style_dim])
    hx = xres[:, style_dim:style_dim + hidden]

    keys = params["gst_keys"].astype(f32)
    scores = (q @ keys.T) / math.sqrt(style_dim)
    p = jax.nn.softmax(scores, axis=-1)
    l = p @ keys                                      # np.squeeze: no-op for B>1

    lres = l @ params["lw"].astype(f32) + params["lb"]
    h = jnp.maximum(hx + lres[:, :hidden], 0.0)
    head = h @ params["enc_head_w"].astype(f32) + params["enc_head_b"]
    z_mu, z_lv = head[:, :z_dim], head[:, z_dim:2 * z_dim]
    z = z_mu + jnp.exp(z_lv * 0.5) * eps
    hd = jnp.tanh(z @ params["dec_w1_z"].astype(f32) + lres[:, hidden:2 * hidden])
    x_logvar = hd @ params["dec_w2"].astype(f32) + params["dec_b2"]
    return x_logvar.reshape(x.shape), z_mu, z_lv


# -----------------------------------------------------------------------------
if __name__ == "__main__":
    B, F, T = 2, 16, 16          # x: [batch, freq, time]
    X_DIM = F * T                # 256
    STYLE_DIM = 32
    N_TOKENS = 8
    HIDDEN = 64
    Z_DIM = 16

    root = jax.random.PRNGKey(0)
    k_param, k_x, k_eps = jax.random.split(root, 3)

    params = init_params(k_param, X_DIM, STYLE_DIM, N_TOKENS, HIDDEN, Z_DIM)
    x = jax.random.normal(k_x, (B, F, T), jnp.float32)
    eps = jax.random.normal(k_eps, (B, Z_DIM), jnp.float32)   # torch.randn stand-in

    fwd = jax.jit(cvae_forward)
    x_logvar, z_mu, z_logvar = fwd(params, x, eps)
    jax.block_until_ready((x_logvar, z_mu, z_logvar))

    assert x_logvar.shape == x.shape
    assert z_mu.shape == (B, Z_DIM) and z_logvar.shape == (B, Z_DIM)
    assert bool(jnp.all(jnp.isfinite(x_logvar)))

    # loose numeric check vs. pure-JAX f32 reference (kernel uses bf16 MXU
    # operands + approx reciprocal, hence generous tolerance)
    r_xlv, r_mu, r_lv = cvae_forward_ref(params, x, eps)
    assert float(jnp.max(jnp.abs(x_logvar - r_xlv))) < 1e-1
    assert float(jnp.max(jnp.abs(z_mu - r_mu))) < 1e-1
    assert float(jnp.max(jnp.abs(z_logvar - r_lv))) < 1e-1

    print("KERNEL_OK")
</pallas_src>

<mosaic_0001>
module attributes {stable_mosaic.version = 11 : i64} {
  func.func @_cvae_fused_kernel(%arg0: i32, %arg1: memref<8x256xbf16, #tpu.memory_space<vmem>>, %arg2: memref<8x16xf32, #tpu.memory_space<vmem>>, %arg3: memref<256x128xbf16, #tpu.memory_space<vmem>>, %arg4: memref<1x128xf32, #tpu.memory_space<vmem>>, %arg5: memref<8x32xbf16, #tpu.memory_space<vmem>>, %arg6: memref<32x8xbf16, #tpu.memory_space<vmem>>, %arg7: memref<32x128xbf16, #tpu.memory_space<vmem>>, %arg8: memref<1x128xf32, #tpu.memory_space<vmem>>, %arg9: memref<64x128xbf16, #tpu.memory_space<vmem>>, %arg10: memref<1x128xf32, #tpu.memory_space<vmem>>, %arg11: memref<16x64xbf16, #tpu.memory_space<vmem>>, %arg12: memref<64x256xbf16, #tpu.memory_space<vmem>>, %arg13: memref<1x256xf32, #tpu.memory_space<vmem>>, %arg14: memref<8x256xf32, #tpu.memory_space<vmem>>, %arg15: memref<8x128xf32, #tpu.memory_space<vmem>>) attributes {dimension_semantics = [#tpu.dimension_semantics<parallel>], iteration_bounds = array<i64: 1>, scalar_prefetch = 0 : i64, scratch_operands = 0 : i64, tpu.core_type = #tpu.core_type<tc>, window_params = [{transform_indices = @transform_0, window_bounds = array<i64: 8, 256>}, {transform_indices = @transform_1, window_bounds = array<i64: 8, 16>}, {pipeline_mode = #tpu.pipeline_mode<synchronous>, transform_indices = @transform_2, window_bounds = array<i64: 256, 128>}, {pipeline_mode = #tpu.pipeline_mode<synchronous>, transform_indices = @transform_3, window_bounds = array<i64: 1, 128>}, {pipeline_mode = #tpu.pipeline_mode<synchronous>, transform_indices = @transform_4, window_bounds = array<i64: 8, 32>}, {pipeline_mode = #tpu.pipeline_mode<synchronous>, transform_indices = @transform_5, window_bounds = array<i64: 32, 8>}, {pipeline_mode = #tpu.pipeline_mode<synchronous>, transform_indices = @transform_6, window_bounds = array<i64: 32, 128>}, {pipeline_mode = #tpu.pipeline_mode<synchronous>, transform_indices = @transform_7, window_bounds = array<i64: 1, 128>}, {pipeline_mode = #tpu.pipeline_mode<synchronous>, transform_indices = @transform_8, window_bounds = array<i64: 64, 128>}, {pipeline_mode = #tpu.pipeline_mode<synchronous>, transform_indices = @transform_9, window_bounds = array<i64: 1, 128>}, {pipeline_mode = #tpu.pipeline_mode<synchronous>, transform_indices = @transform_10, window_bounds = array<i64: 16, 64>}, {pipeline_mode = #tpu.pipeline_mode<synchronous>, transform_indices = @transform_11, window_bounds = array<i64: 64, 256>}, {pipeline_mode = #tpu.pipeline_mode<synchronous>, transform_indices = @transform_12, window_bounds = array<i64: 1, 256>}, {transform_indices = @transform_13, window_bounds = array<i64: 8, 256>}, {transform_indices = @transform_14, window_bounds = array<i64: 8, 128>}]} {
    %c0 = arith.constant 0 : index
    %c0_0 = arith.constant 0 : index
    %0 = vector.load %arg1[%c0, %c0_0] : memref<8x256xbf16, #tpu.memory_space<vmem>>, vector<8x256xbf16>
    %c0_1 = arith.constant 0 : index
    %c0_2 = arith.constant 0 : index
    %1 = vector.load %arg3[%c0_1, %c0_2] : memref<256x128xbf16, #tpu.memory_space<vmem>>, vector<256x128xbf16>
    %cst = arith.constant dense<0.000000e+00> : vector<8x128xf32>
    %2 = tpu.matmul %0, %1, %cst {dimension_numbers = #tpu.dot_dimension_numbers<[1], [0], [0], [1], [0, 0, 1, 1], [], []>} : vector<8x256xbf16>, vector<256x128xbf16>, vector<8x128xf32> -> vector<8x128xf32>
    %c0_3 = arith.constant 0 : index
    %c0_4 = arith.constant 0 : index
    %3 = vector.load %arg4[%c0_3, %c0_4] : memref<1x128xf32, #tpu.memory_space<vmem>>, vector<1x128xf32>
    %4 = vector.broadcast %3 : vector<1x128xf32> to vector<8x128xf32>
    %5 = arith.addf %2, %4 : vector<8x128xf32>
    %6 = vector.extract_strided_slice %5 {offsets = [0, 0], sizes = [8, 32], strides = [1, 1]} : vector<8x128xf32> to vector<8x32xf32>
    %7 = math.tanh %6 : vector<8x32xf32>
    %8 = vector.extract_strided_slice %5 {offsets = [0, 32], sizes = [8, 64], strides = [1, 1]} : vector<8x128xf32> to vector<8x64xf32>
    %9 = arith.truncf %7 : vector<8x32xf32> to vector<8x32xbf16>
    %c0_5 = arith.constant 0 : index
    %c0_6 = arith.constant 0 : index
    %10 = vector.load %arg6[%c0_5, %c0_6] : memref<32x8xbf16, #tpu.memory_space<vmem>>, vector<32x8xbf16>
    %cst_7 = arith.constant dense<0.000000e+00> : vector<8x8xf32>
    %11 = tpu.matmul %9, %10, %cst_7 {dimension_numbers = #tpu.dot_dimension_numbers<[1], [0], [0], [1], [0, 0, 1, 1], [], []>} : vector<8x32xbf16>, vector<32x8xbf16>, vector<8x8xf32> -> vector<8x8xf32>
    %cst_8 = arith.constant 0.176776692 : f32
    %12 = vector.broadcast %cst_8 : f32 to vector<8x8xf32>
    %13 = arith.mulf %11, %12 : vector<8x8xf32>
    %14 = math.exp %13 : vector<8x8xf32>
    %cst_9 = arith.constant dense<0.000000e+00> : vector<8xf32>
    %15 = vector.multi_reduction <add>, %14, %cst_9 [1] : vector<8x8xf32> to vector<8xf32>
    %16 = vector.shape_cast %15 : vector<8xf32> to vector<8x1xf32>
    %17 = tpu.reciprocal %16 {approx = true} : vector<8x1xf32> -> vector<8x1xf32>
    %18 = vector.broadcast %17 : vector<8x1xf32> to vector<8x8xf32>
    %19 = arith.mulf %14, %18 : vector<8x8xf32>
    %20 = arith.truncf %19 : vector<8x8xf32> to vector<8x8xbf16>
    %c0_10 = arith.constant 0 : index
    %c0_11 = arith.constant 0 : index
    %21 = vector.load %arg5[%c0_10, %c0_11] : memref<8x32xbf16, #tpu.memory_space<vmem>>, vector<8x32xbf16>
    %cst_12 = arith.constant dense<0.000000e+00> : vector<8x32xf32>
    %22 = tpu.matmul %20, %21, %cst_12 {dimension_numbers = #tpu.dot_dimension_numbers<[1], [0], [0], [1], [0, 0, 1, 1], [], []>} : vector<8x8xbf16>, vector<8x32xbf16>, vector<8x32xf32> -> vector<8x32xf32>
    %23 = arith.truncf %22 : vector<8x32xf32> to vector<8x32xbf16>
    %c0_13 = arith.constant 0 : index
    %c0_14 = arith.constant 0 : index
    %24 = vector.load %arg7[%c0_13, %c0_14] : memref<32x128xbf16, #tpu.memory_space<vmem>>, vector<32x128xbf16>
    %cst_15 = arith.constant dense<0.000000e+00> : vector<8x128xf32>
    %25 = tpu.matmul %23, %24, %cst_15 {dimension_numbers = #tpu.dot_dimension_numbers<[1], [0], [0], [1], [0, 0, 1, 1], [], []>} : vector<8x32xbf16>, vector<32x128xbf16>, vector<8x128xf32> -> vector<8x128xf32>
    %c0_16 = arith.constant 0 : index
    %c0_17 = arith.constant 0 : index
    %26 = vector.load %arg8[%c0_16, %c0_17] : memref<1x128xf32, #tpu.memory_space<vmem>>, vector<1x128xf32>
    %27 = vector.broadcast %26 : vector<1x128xf32> to vector<8x128xf32>
    %28 = arith.addf %25, %27 : vector<8x128xf32>
    %29 = vector.extract_strided_slice %28 {offsets = [0, 0], sizes = [8, 64], strides = [1, 1]} : vector<8x128xf32> to vector<8x64xf32>
    %30 = vector.extract_strided_slice %28 {offsets = [0, 64], sizes = [8, 64], strides = [1, 1]} : vector<8x128xf32> to vector<8x64xf32>
    %31 = arith.addf %8, %29 : vector<8x64xf32>
    %cst_18 = arith.constant 0.000000e+00 : f32
    %32 = vector.broadcast %cst_18 : f32 to vector<8x64xf32>
    %33 = arith.maximumf %31, %32 : vector<8x64xf32>
    %34 = arith.truncf %33 : vector<8x64xf32> to vector<8x64xbf16>
    %c0_19 = arith.constant 0 : index
    %c0_20 = arith.constant 0 : index
    %35 = vector.load %arg9[%c0_19, %c0_20] : memref<64x128xbf16, #tpu.memory_space<vmem>>, vector<64x128xbf16>
    %cst_21 = arith.constant dense<0.000000e+00> : vector<8x128xf32>
    %36 = tpu.matmul %34, %35, %cst_21 {dimension_numbers = #tpu.dot_dimension_numbers<[1], [0], [0], [1], [0, 0, 1, 1], [], []>} : vector<8x64xbf16>, vector<64x128xbf16>, vector<8x128xf32> -> vector<8x128xf32>
    %c0_22 = arith.constant 0 : index
    %c0_23 = arith.constant 0 : index
    %37 = vector.load %arg10[%c0_22, %c0_23] : memref<1x128xf32, #tpu.memory_space<vmem>>, vector<1x128xf32>
    %38 = vector.broadcast %37 : vector<1x128xf32> to vector<8x128xf32>
    %39 = arith.addf %36, %38 : vector<8x128xf32>
    %c0_24 = arith.constant 0 : index
    %c0_25 = arith.constant 0 : index
    %40 = vector.load %arg15[%c0_24, %c0_25] : memref<8x128xf32, #tpu.memory_space<vmem>>, vector<8x128xf32>
    tpu.vector_store %arg15[%c0_24, %c0_25], %39 {strides = array<i32>} : memref<8x128xf32, #tpu.memory_space<vmem>>, vector<8x128xf32>,
    %41 = vector.extract_strided_slice %39 {offsets = [0, 0], sizes = [8, 16], strides = [1, 1]} : vector<8x128xf32> to vector<8x16xf32>
    %42 = vector.extract_strided_slice %39 {offsets = [0, 16], sizes = [8, 16], strides = [1, 1]} : vector<8x128xf32> to vector<8x16xf32>
    %cst_26 = arith.constant 5.000000e-01 : f32
    %43 = vector.broadcast %cst_26 : f32 to vector<8x16xf32>
    %44 = arith.mulf %42, %43 : vector<8x16xf32>
    %45 = math.exp %44 : vector<8x16xf32>
    %c0_27 = arith.constant 0 : index
    %c0_28 = arith.constant 0 : index
    %46 = vector.load %arg2[%c0_27, %c0_28] : memref<8x16xf32, #tpu.memory_space<vmem>>, vector<8x16xf32>
    %47 = arith.mulf %45, %46 : vector<8x16xf32>
    %48 = arith.addf %41, %47 : vector<8x16xf32>
    %49 = arith.truncf %48 : vector<8x16xf32> to vector<8x16xbf16>
    %c0_29 = arith.constant 0 : index
    %c0_30 = arith.constant 0 : index
    %50 = vector.load %arg11[%c0_29, %c0_30] : memref<16x64xbf16, #tpu.memory_space<vmem>>, vector<16x64xbf16>
    %cst_31 = arith.constant dense<0.000000e+00> : vector<8x64xf32>
    %51 = tpu.matmul %49, %50, %cst_31 {dimension_numbers = #tpu.dot_dimension_numbers<[1], [0], [0], [1], [0, 0, 1, 1], [], []>} : vector<8x16xbf16>, vector<16x64xbf16>, vector<8x64xf32> -> vector<8x64xf32>
    %52 = arith.addf %51, %30 : vector<8x64xf32>
    %53 = math.tanh %52 : vector<8x64xf32>
    %54 = arith.truncf %53 : vector<8x64xf32> to vector<8x64xbf16>
    %c0_32 = arith.constant 0 : index
    %c0_33 = arith.constant 0 : index
    %55 = vector.load %arg12[%c0_32, %c0_33] : memref<64x256xbf16, #tpu.memory_space<vmem>>, vector<64x256xbf16>
    %cst_34 = arith.constant dense<0.000000e+00> : vector<8x256xf32>
    %56 = tpu.matmul %54, %55, %cst_34 {dimension_numbers = #tpu.dot_dimension_numbers<[1], [0], [0], [1], [0, 0, 1, 1], [], []>} : vector<8x64xbf16>, vector<64x256xbf16>, vector<8x256xf32> -> vector<8x256xf32>
    %c0_35 = arith.constant 0 : index
    %c0_36 = arith.constant 0 : index
    %57 = vector.load %arg13[%c0_35, %c0_36] : memref<1x256xf32, #tpu.memory_space<vmem>>, vector<1x256xf32>
    %58 = vector.broadcast %57 : vector<1x256xf32> to vector<8x256xf32>
    %59 = arith.addf %56, %58 : vector<8x256xf32>
    %c0_37 = arith.constant 0 : index
    %c0_38 = arith.constant 0 : index
    %60 = vector.load %arg14[%c0_37, %c0_38] : memref<8x256xf32, #tpu.memory_space<vmem>>, vector<8x256xf32>
    tpu.vector_store %arg14[%c0_37, %c0_38], %59 {strides = array<i32>} : memref<8x256xf32, #tpu.memory_space<vmem>>, vector<8x256xf32>,
    return
  }
  func.func @transform_0(%arg0: i32) -> (i32, i32) {
    %c0_i32 = arith.constant 0 : i32
    %c0_i32_0 = arith.constant 0 : i32
    return %arg0, %c0_i32 : i32, i32
  }
  func.func @transform_1(%arg0: i32) -> (i32, i32) {
    %c0_i32 = arith.constant 0 : i32
    %c0_i32_0 = arith.constant 0 : i32
    return %arg0, %c0_i32 : i32, i32
  }
  func.func @transform_2(%arg0: i32) -> (i32, i32) {
    %c0_i32 = arith.constant 0 : i32
    %c0_i32_0 = arith.constant 0 : i32
    %c0_i32_1 = arith.constant 0 : i32
    return %c0_i32, %c0_i32_0 : i32, i32
  }
  func.func @transform_3(%arg0: i32) -> (i32, i32) {
    %c0_i32 = arith.constant 0 : i32
    %c0_i32_0 = arith.constant 0 : i32
    %c0_i32_1 = arith.constant 0 : i32
    return %c0_i32, %c0_i32_0 : i32, i32
  }
  func.func @transform_4(%arg0: i32) -> (i32, i32) {
    %c0_i32 = arith.constant 0 : i32
    %c0_i32_0 = arith.constant 0 : i32
    %c0_i32_1 = arith.constant 0 : i32
    return %c0_i32, %c0_i32_0 : i32, i32
  }
  func.func @transform_5(%arg0: i32) -> (i32, i32) {
    %c0_i32 = arith.constant 0 : i32
    %c0_i32_0 = arith.constant 0 : i32
    %c0_i32_1 = arith.constant 0 : i32
    return %c0_i32, %c0_i32_0 : i32, i32
  }
  func.func @transform_6(%arg0: i32) -> (i32, i32) {
    %c0_i32 = arith.constant 0 : i32
    %c0_i32_0 = arith.constant 0 : i32
    %c0_i32_1 = arith.constant 0 : i32
    return %c0_i32, %c0_i32_0 : i32, i32
  }
  func.func @transform_7(%arg0: i32) -> (i32, i32) {
    %c0_i32 = arith.constant 0 : i32
    %c0_i32_0 = arith.constant 0 : i32
    %c0_i32_1 = arith.constant 0 : i32
    return %c0_i32, %c0_i32_0 : i32, i32
  }
  func.func @transform_8(%arg0: i32) -> (i32, i32) {
    %c0_i32 = arith.constant 0 : i32
    %c0_i32_0 = arith.constant 0 : i32
    %c0_i32_1 = arith.constant 0 : i32
    return %c0_i32, %c0_i32_0 : i32, i32
  }
  func.func @transform_9(%arg0: i32) -> (i32, i32) {
    %c0_i32 = arith.constant 0 : i32
    %c0_i32_0 = arith.constant 0 : i32
    %c0_i32_1 = arith.constant 0 : i32
    return %c0_i32, %c0_i32_0 : i32, i32
  }
  func.func @transform_10(%arg0: i32) -> (i32, i32) {
    %c0_i32 = arith.constant 0 : i32
    %c0_i32_0 = arith.constant 0 : i32
    %c0_i32_1 = arith.constant 0 : i32
    return %c0_i32, %c0_i32_0 : i32, i32
  }
  func.func @transform_11(%arg0: i32) -> (i32, i32) {
    %c0_i32 = arith.constant 0 : i32
    %c0_i32_0 = arith.constant 0 : i32
    %c0_i32_1 = arith.constant 0 : i32
    return %c0_i32, %c0_i32_0 : i32, i32
  }
  func.func @transform_12(%arg0: i32) -> (i32, i32) {
    %c0_i32 = arith.constant 0 : i32
    %c0_i32_0 = arith.constant 0 : i32
    %c0_i32_1 = arith.constant 0 : i32
    return %c0_i32, %c0_i32_0 : i32, i32
  }
  func.func @transform_13(%arg0: i32) -> (i32, i32) {
    %c0_i32 = arith.constant 0 : i32
    %c0_i32_0 = arith.constant 0 : i32
    return %arg0, %c0_i32 : i32, i32
  }
  func.func @transform_14(%arg0: i32) -> (i32, i32) {
    %c0_i32 = arith.constant 0 : i32
    %c0_i32_0 = arith.constant 0 : i32
    return %arg0, %c0_i32 : i32, i32
  }
}

</mosaic_0001>

<llo_original>
// kernel: cvae_forward.1
$region0: #{cvae_forward.1}
  #allocation0 [shape = 'u32[]', space=smem, size = 0x4, offset = 0x4, fixed_abs, tag = 'smem constant byte address 0x4 - core index']
  #allocation1 [shape = 'u32[144,128]{1,0:T(1,128)}', space=vmem, size = 0x12000, scoped, tag = 'internal scratch']
  %s0 = inlined_call_operand.vmem [shape: bf16[8,256], index: 0, kind: input, shape index: {}]
  %s1 = inlined_call_operand.vmem [shape: f32[8,16], index: 1, kind: input, shape index: {}]
  %s2 = inlined_call_operand.vmem [shape: bf16[256,128], index: 2, kind: input, shape index: {}]
  %s3 = inlined_call_operand.vmem [shape: f32[1,128], index: 3, kind: input, shape index: {}]
  %s4 = inlined_call_operand.hbm [shape: bf16[8,32], index: 4, kind: input, shape index: {}]
  %s5 = inlined_call_operand.vmem [shape: bf16[32,8], index: 5, kind: input, shape index: {}]
  %s6 = inlined_call_operand.vmem [shape: bf16[32,128], index: 6, kind: input, shape index: {}]
  %s7 = inlined_call_operand.hbm [shape: f32[1,128], index: 7, kind: input, shape index: {}]
  %s8 = inlined_call_operand.hbm [shape: bf16[64,128], index: 8, kind: input, shape index: {}]
  %s9 = inlined_call_operand.hbm [shape: f32[1,128], index: 9, kind: input, shape index: {}]
  %s10 = inlined_call_operand.hbm [shape: bf16[16,64], index: 10, kind: input, shape index: {}]
  %s11 = inlined_call_operand.hbm [shape: bf16[64,256], index: 11, kind: input, shape index: {}]
  %s12 = inlined_call_operand.hbm [shape: f32[1,256], index: 12, kind: input, shape index: {}]
  %s13 = inlined_call_operand.vmem [shape: f32[8,256], index: 13, kind: output, shape index: {0}]
  %s14 = inlined_call_operand.vmem [shape: f32[8,128], index: 14, kind: output, shape index: {1}]
  %15 = xla_tuple %s13, %s14
  %s16 = sld [smem:[#allocation0]]
  $region98: #{cvae_forward.1} parent=0
    _
  %s18 = ssub.s32 1, %s16
  %s19 = scalar_select 0, %s18, %s16
  $region1: #{cvae_forward.1} parent=0
    #allocation2 [shape = 'u8[2048]{0}', space=vmem, size = 0x800, scoped, tag = 'input window, operand 4, single buffered']
    #allocation3 [shape = 's32[1]{0}', space=sflag, size = 0x4, scoped, tag = 'scoped memory for cvae_forward.1']
    #allocation4 [shape = 'u8[512]{0}', space=vmem, size = 0x400, scoped, tag = 'input window, operand 7, single buffered']
    #allocation5 [shape = 's32[1]{0}', space=sflag, size = 0x4, scoped, tag = 'scoped memory for cvae_forward.1']
    #allocation6 [shape = 'u8[16384]{0}', space=vmem, size = 0x4000, scoped, tag = 'input window, operand 8, single buffered']
    #allocation7 [shape = 'u8[512]{0}', space=vmem, size = 0x400, scoped, tag = 'input window, operand 9, single buffered']
    #allocation8 [shape = 's32[1]{0}', space=sflag, size = 0x4, scoped, tag = 'scoped memory for cvae_forward.1']
    #allocation9 [shape = 'u8[4096]{0}', space=vmem, size = 0x1000, scoped, tag = 'input window, operand 10, single buffered']
    #allocation10 [shape = 'u8[32768]{0}', space=vmem, size = 0x8000, scoped, tag = 'input window, operand 11, single buffered']
    #allocation11 [shape = 's32[1]{0}', space=sflag, size = 0x4, scoped, tag = 'scoped memory for cvae_forward.1']
    #allocation12 [shape = 'u8[1024]{0}', space=vmem, size = 0x400, scoped, tag = 'input window, operand 12, single buffered']
    %20 = vsyncpa [#allocation3], 0
    %21 = vsyncpa [#allocation5], 0
    %22 = vsyncpa [#allocation8], 0
    %23 = vsyncpa [#allocation11], 0
    // Predicated region
    $region2: #{cvae_forward.1} parent=1 // pred_check
      _
    $region3: #{cvae_forward.1} parent=1 // pred_check_branch
      %25 = sbr.rel (0) target = $region5
    $region4: #{cvae_forward.1} parent=1 // pred_region
      _
    $region5: #{cvae_forward.1} parent=1 // pred_fallthru
      _
    // Predicated region
    $region6: #{cvae_forward.1} parent=1 // pred_check
      _
    $region7: #{cvae_forward.1} parent=1 // pred_check_branch
      %27 = sbr.rel (0) target = $region9
    $region8: #{cvae_forward.1} parent=1 // pred_region
      _
    $region9: #{cvae_forward.1} parent=1 // pred_fallthru
      _
    // Predicated region
    $region10: #{cvae_forward.1} parent=1 // pred_check
      _
    $region11: #{cvae_forward.1} parent=1 // pred_check_branch
      %29 = sbr.rel (0) target = $region13
    $region12: #{cvae_forward.1} parent=1 // pred_region
      _
    $region13: #{cvae_forward.1} parent=1 // pred_fallthru
      _
    // Predicated region
    $region14: #{cvae_forward.1} parent=1 // pred_check
      _
    $region15: #{cvae_forward.1} parent=1 // pred_check_branch
      %31 = sbr.rel (0) target = $region17
    $region16: #{cvae_forward.1} parent=1 // pred_region
      _
    $region17: #{cvae_forward.1} parent=1 // pred_fallthru
      _
    // Predicated region
    $region18: #{cvae_forward.1} parent=1 // pred_check
      _
    $region19: #{cvae_forward.1} parent=1 // pred_check_branch
      %33 = sbr.rel (0) target = $region21
    $region20: #{cvae_forward.1} parent=1 // pred_region
      %s35 = ssub.s32 64, 64
      %36 = vsyncadd [#allocation3], %s35
      %s38 = sshll.u32 [#allocation2], 4
      %s39 = int_to_ptr.vmem [resolvable:$true] %s38
      %41 = dma.hbm_to_vmem [thread:$0]  %s4, 64, %s39, [#allocation3]
    $region21: #{cvae_forward.1} parent=1 // pred_fallthru
      _
    // Predicated region
    $region22: #{cvae_forward.1} parent=1 // pred_check
      _
    $region23: #{cvae_forward.1} parent=1 // pred_check_branch
      %43 = sbr.rel (0) target = $region25
    $region24: #{cvae_forward.1} parent=1 // pred_region
      _
    $region25: #{cvae_forward.1} parent=1 // pred_fallthru
      _
    // Predicated region
    $region26: #{cvae_forward.1} parent=1 // pred_check
      _
    $region27: #{cvae_forward.1} parent=1 // pred_check_branch
      %45 = sbr.rel (0) target = $region29
    $region28: #{cvae_forward.1} parent=1 // pred_region
      _
    $region29: #{cvae_forward.1} parent=1 // pred_fallthru
      _
    // Predicated region
    $region30: #{cvae_forward.1} parent=1 // pred_check
      _
    $region31: #{cvae_forward.1} parent=1 // pred_check_branch
      %47 = sbr.rel (0) target = $region33
    $region32: #{cvae_forward.1} parent=1 // pred_region
      %s49 = ssub.s32 16, 16
      %50 = vsyncadd [#allocation5], %s49
      %s52 = sshll.u32 [#allocation4], 4
      %s53 = int_to_ptr.vmem [resolvable:$true] %s52
      %55 = dma.hbm_to_vmem [thread:$0]  %s7, 16, %s53, [#allocation5]
    $region33: #{cvae_forward.1} parent=1 // pred_fallthru
      _
    // Predicated region
    $region34: #{cvae_forward.1} parent=1 // pred_check
      _
    $region35: #{cvae_forward.1} parent=1 // pred_check_branch
      %57 = sbr.rel (0) target = $region37
    $region36: #{cvae_forward.1} parent=1 // pred_region
      %s59 = ssub.s32 512, 512
      %60 = vsyncadd [#allocation5], %s59
      %s61 = sshll.u32 [#allocation6], 4
      %s62 = int_to_ptr.vmem [resolvable:$true] %s61
      %67 = dma.hbm_to_vmem [thread:$0]  %s8, 512, %s62, [#allocation5], 64, 64, 4
    $region37: #{cvae_forward.1} parent=1 // pred_fallthru
      _
    // Predicated region
    $region38: #{cvae_forward.1} parent=1 // pred_check
      _
    $region39: #{cvae_forward.1} parent=1 // pred_check_branch
      %69 = sbr.rel (0) target = $region41
    $region40: #{cvae_forward.1} parent=1 // pred_region
      %s71 = ssub.s32 16, 16
      %72 = vsyncadd [#allocation8], %s71
      %s74 = sshll.u32 [#allocation7], 4
      %s75 = int_to_ptr.vmem [resolvable:$true] %s74
      %77 = dma.hbm_to_vmem [thread:$0]  %s9, 16, %s75, [#allocation8]
    $region41: #{cvae_forward.1} parent=1 // pred_fallthru
      _
    // Predicated region
    $region42: #{cvae_forward.1} parent=1 // pred_check
      _
    $region43: #{cvae_forward.1} parent=1 // pred_check_branch
      %79 = sbr.rel (0) target = $region45
    $region44: #{cvae_forward.1} parent=1 // pred_region
      %s81 = ssub.s32 128, 128
      %82 = vsyncadd [#allocation8], %s81
      %s83 = sshll.u32 [#allocation9], 4
      %s84 = int_to_ptr.vmem [resolvable:$true] %s83
      %89 = dma.hbm_to_vmem [thread:$0]  %s10, 128, %s84, [#allocation8], 64, 64, 4
    $region45: #{cvae_forward.1} parent=1 // pred_fallthru
      _
    // Predicated region
    $region46: #{cvae_forward.1} parent=1 // pred_check
      _
    $region47: #{cvae_forward.1} parent=1 // pred_check_branch
      %91 = sbr.rel (0) target = $region49
    $region48: #{cvae_forward.1} parent=1 // pred_region
      %s93 = ssub.s32 1024, 1024
      %94 = vsyncadd [#allocation11], %s93
      %s95 = sshll.u32 [#allocation10], 4
      %s96 = int_to_ptr.vmem [resolvable:$true] %s95
      %101 = dma.hbm_to_vmem [thread:$0]  %s11, 1024, %s96, [#allocation11], 128, 128, 8
    $region49: #{cvae_forward.1} parent=1 // pred_fallthru
      _
    // Predicated region
    $region50: #{cvae_forward.1} parent=1 // pred_check
      _
    $region51: #{cvae_forward.1} parent=1 // pred_check_branch
      %103 = sbr.rel (0) target = $region53
    $region52: #{cvae_forward.1} parent=1 // pred_region
      %s105 = ssub.s32 32, 32
      %106 = vsyncadd [#allocation11], %s105
      %s108 = sshll.u32 [#allocation12], 4
      %s109 = int_to_ptr.vmem [resolvable:$true] %s108
      %111 = dma.hbm_to_vmem [thread:$0]  %s12, 32, %s109, [#allocation11]
    $region53: #{cvae_forward.1} parent=1 // pred_fallthru
      _
    // Predicated region
    $region54: #{cvae_forward.1} parent=1 // pred_check
      _
    $region55: #{cvae_forward.1} parent=1 // pred_check_branch
      %113 = sbr.rel (0) target = $region57
    $region56: #{cvae_forward.1} parent=1 // pred_region
      %114 = dma.done [#allocation3], 64
    $region57: #{cvae_forward.1} parent=1 // pred_fallthru
      _
    // Predicated region
    $region58: #{cvae_forward.1} parent=1 // pred_check
      _
    $region59: #{cvae_forward.1} parent=1 // pred_check_branch
      %116 = sbr.rel (0) target = $region61
    $region60: #{cvae_forward.1} parent=1 // pred_region
      %117 = dma.done [#allocation5], 16
    $region61: #{cvae_forward.1} parent=1 // pred_fallthru
      _
    // Predicated region
    $region62: #{cvae_forward.1} parent=1 // pred_check
      _
    $region63: #{cvae_forward.1} parent=1 // pred_check_branch
      %119 = sbr.rel (0) target = $region65
    $region64: #{cvae_forward.1} parent=1 // pred_region
      %120 = dma.done [#allocation5], 512
    $region65: #{cvae_forward.1} parent=1 // pred_fallthru
      _
    // Predicated region
    $region66: #{cvae_forward.1} parent=1 // pred_check
      _
    $region67: #{cvae_forward.1} parent=1 // pred_check_branch
      %122 = sbr.rel (0) target = $region69
    $region68: #{cvae_forward.1} parent=1 // pred_region
      %123 = dma.done [#allocation8], 16
    $region69: #{cvae_forward.1} parent=1 // pred_fallthru
      _
    // Predicated region
    $region70: #{cvae_forward.1} parent=1 // pred_check
      _
    $region71: #{cvae_forward.1} parent=1 // pred_check_branch
      %125 = sbr.rel (0) target = $region73
    $region72: #{cvae_forward.1} parent=1 // pred_region
      %126 = dma.done [#allocation8], 128
    $region73: #{cvae_forward.1} parent=1 // pred_fallthru
      _
    // Predicated region
    $region74: #{cvae_forward.1} parent=1 // pred_check
      _
    $region75: #{cvae_forward.1} parent=1 // pred_check_branch
      %128 = sbr.rel (0) target = $region77
    $region76: #{cvae_forward.1} parent=1 // pred_region
      %129 = dma.done [#allocation11], 1024
    $region77: #{cvae_forward.1} parent=1 // pred_fallthru
      _
    // Predicated region
    $region78: #{cvae_forward.1} parent=1 // pred_check
      _
    $region79: #{cvae_forward.1} parent=1 // pred_check_branch
      %131 = sbr.rel (0) target = $region81
    $region80: #{cvae_forward.1} parent=1 // pred_region
      %132 = dma.done [#allocation11], 32
    $region81: #{cvae_forward.1} parent=1 // pred_fallthru
      _
    %v134 = vld [vmem:[%s0] sm:$0xff]
    %v135 = vld [vmem:[%s2] sm:$0xf]
    %v136 = vld [vmem:[%s2 + $0x4] sm:$0xf]
    %v137 = vld [vmem:[%s2 + $0x8] sm:$0xf]
    %v138 = vld [vmem:[%s2 + $0xc] sm:$0xf]
    %v139 = vld [vmem:[%s2 + $0x10] sm:$0xf]
    %v140 = vld [vmem:[%s2 + $0x14] sm:$0xf]
    %v141 = vld [vmem:[%s2 + $0x18] sm:$0xf]
    %v142 = vld [vmem:[%s2 + $0x1c] sm:$0xf]
    %v143 = vld [vmem:[%s2 + $0x20] sm:$0xf]
    %v144 = vld [vmem:[%s2 + $0x24] sm:$0xf]
    %v145 = vld [vmem:[%s2 + $0x28] sm:$0xf]
    %v146 = vld [vmem:[%s2 + $0x2c] sm:$0xf]
    %v147 = vld [vmem:[%s2 + $0x30] sm:$0xf]
    %v148 = vld [vmem:[%s2 + $0x34] sm:$0xf]
    %v149 = vld [vmem:[%s2 + $0x38] sm:$0xf]
    %v150 = vld [vmem:[%s2 + $0x3c] sm:$0xf]
    %v151 = vld [vmem:[%s2 + $0x40] sm:$0xf]
    %v152 = vld [vmem:[%s2 + $0x44] sm:$0xf]
    %v153 = vld [vmem:[%s2 + $0x48] sm:$0xf]
    %v154 = vld [vmem:[%s2 + $0x4c] sm:$0xf]
    %v155 = vld [vmem:[%s2 + $0x50] sm:$0xf]
    %v156 = vld [vmem:[%s2 + $0x54] sm:$0xf]
    %v157 = vld [vmem:[%s2 + $0x58] sm:$0xf]
    %v158 = vld [vmem:[%s2 + $0x5c] sm:$0xf]
    %v159 = vld [vmem:[%s2 + $0x60] sm:$0xf]
    %v160 = vld [vmem:[%s2 + $0x64] sm:$0xf]
    %v161 = vld [vmem:[%s2 + $0x68] sm:$0xf]
    %v162 = vld [vmem:[%s2 + $0x6c] sm:$0xf]
    %v163 = vld [vmem:[%s2 + $0x70] sm:$0xf]
    %v164 = vld [vmem:[%s2 + $0x74] sm:$0xf]
    %v165 = vld [vmem:[%s2 + $0x78] sm:$0xf]
    %v166 = vld [vmem:[%s2 + $0x7c] sm:$0xf]
    %v167 = vld [vmem:[%s3] sm:$0x1]
    %v169 = vlaneseq
    %v170 = vshrl.u32 %v169, 7
    %v171 = vsub.s32 0, %v170
    %v172 = vrot.slane %v167, %v171
    %v175 = vunpack.c.l.b16 %v134
    %v176 = vunpack.c.h.b16 %v134
    %v177 = vpack.c.b16 %v175, %v175
    %v178 = vpack.c.b16 %v176, %v176
    %v213 = vunpack.c.l.b16 %v135
    %v214 = vunpack.c.l.b16 %v136
    %v215 = vunpack.c.l.b16 %v137
    %v216 = vunpack.c.l.b16 %v138
    %v217 = vunpack.c.l.b16 %v139
    %v218 = vunpack.c.l.b16 %v140
    %v219 = vunpack.c.l.b16 %v141
    %v220 = vunpack.c.l.b16 %v142
    %v221 = vunpack.c.l.b16 %v143
    %v222 = vunpack.c.l.b16 %v144
    %v223 = vunpack.c.l.b16 %v145
    %v224 = vunpack.c.l.b16 %v146
    %v225 = vunpack.c.l.b16 %v147
    %v226 = vunpack.c.l.b16 %v148
    %v227 = vunpack.c.l.b16 %v149
    %v228 = vunpack.c.l.b16 %v150
    %v229 = vunpack.c.l.b16 %v151
    %v230 = vunpack.c.l.b16 %v152
    %v231 = vunpack.c.l.b16 %v153
    %v232 = vunpack.c.l.b16 %v154
    %v233 = vunpack.c.l.b16 %v155
    %v234 = vunpack.c.l.b16 %v156
    %v235 = vunpack.c.l.b16 %v157
    %v236 = vunpack.c.l.b16 %v158
    %v237 = vunpack.c.l.b16 %v159
    %v238 = vunpack.c.l.b16 %v160
    %v239 = vunpack.c.l.b16 %v161
    %v240 = vunpack.c.l.b16 %v162
    %v241 = vunpack.c.l.b16 %v163
    %v242 = vunpack.c.l.b16 %v164
    %v243 = vunpack.c.l.b16 %v165
    %v244 = vunpack.c.l.b16 %v166
    %v245 = vpack.c.b16 %v214, %v213
    %v246 = vpack.c.b16 %v216, %v215
    %v247 = vpack.c.b16 %v218, %v217
    %v248 = vpack.c.b16 %v220, %v219
    %v249 = vpack.c.b16 %v222, %v221
    %v250 = vpack.c.b16 %v224, %v223
    %v251 = vpack.c.b16 %v226, %v225
    %v252 = vpack.c.b16 %v228, %v227
    %v253 = vpack.c.b16 %v230, %v229
    %v254 = vpack.c.b16 %v232, %v231
    %v255 = vpack.c.b16 %v234, %v233
    %v256 = vpack.c.b16 %v236, %v235
    %v257 = vpack.c.b16 %v238, %v237
    %v258 = vpack.c.b16 %v240, %v239
    %v259 = vpack.c.b16 %v242, %v241
    %v260 = vpack.c.b16 %v244, %v243
    %277 = vmatprep.subr.bf16.mxu0 0
    %278 = vmatpush1.bf16.msra.mxu0 %v245
    %279 = vmatprep.subr.bf16.mxu0 0
    %280 = vmatpush1.bf16.msra.mxu0 %v246
    %281 = vmatprep.subr.bf16.mxu0 0
    %282 = vmatpush1.bf16.msra.mxu0 %v247
    %283 = vmatprep.subr.bf16.mxu0 0
    %284 = vmatpush1.bf16.msra.mxu0 %v248
    %285 = vmatprep.subr.bf16.mxu0 0
    %286 = vmatpush1.bf16.msra.mxu0 %v249
    %287 = vmatprep.subr.bf16.mxu0 0
    %288 = vmatpush1.bf16.msra.mxu0 %v250
    %289 = vmatprep.subr.bf16.mxu0 0
    %290 = vmatpush1.bf16.msra.mxu0 %v251
    %291 = vmatprep.subr.bf16.mxu0 0
    %292 = vmatpush1.bf16.msra.mxu0 %v252
    %293 = vmatprep.subr.bf16.mxu0 0
    %294 = vmatpush1.bf16.msra.mxu0 %v253
    %295 = vmatprep.subr.bf16.mxu0 0
    %296 = vmatpush1.bf16.msra.mxu0 %v254
    %297 = vmatprep.subr.bf16.mxu0 0
    %298 = vmatpush1.bf16.msra.mxu0 %v255
    %299 = vmatprep.subr.bf16.mxu0 0
    %300 = vmatpush1.bf16.msra.mxu0 %v256
    %301 = vmatprep.subr.bf16.mxu0 0
    %302 = vmatpush1.bf16.msra.mxu0 %v257
    %303 = vmatprep.subr.bf16.mxu0 0
    %304 = vmatpush1.bf16.msra.mxu0 %v258
    %305 = vmatprep.subr.bf16.mxu0 0
    %306 = vmatpush1.bf16.msra.mxu0 %v259
    %307 = vmatprep.subr.bf16.mxu0 0
    %308 = vmatpush1.bf16.msra.mxu0 %v260
    %309 = vmatprep.mubr.bf16.mxu0 %v178
    %310 = vmatmul.mubr.bf16.gmra.mrb[0].mxu0 %v177
    %v311 = vpop.f32.mrb[0].mxu0
    %v312 = vadd.f32 %v172, %v311
    %v313 = vpop.f32.mrb[0].mxu0
    %v314 = vpop.f32.mrb[0].mxu0
    %v315 = vpop.f32.mrb[0].mxu0
    %316 = vdwg.mxu0
    %v317 = vtanh.pop %v312
    %v318 = vpack.c.bf16 %v317, %v317
    %v319 = vld [vmem:[%s5] sm:$0xf]
    %v320 = vld [vmem:[%s5 + $0x4] sm:$0xf]
    %v321 = vld [vmem:[%s5 + $0x8] sm:$0xf]
    %v322 = vld [vmem:[%s5 + $0xc] sm:$0xf]
    %v327 = vunpack.c.l.b16 %v319
    %v328 = vunpack.c.l.b16 %v320
    %v329 = vunpack.c.l.b16 %v321
    %v330 = vunpack.c.l.b16 %v322
    %v331 = vpack.c.b16 %v328, %v327
    %v332 = vpack.c.b16 %v330, %v329
    %vm335 = vcmask 261120
    %v337 = vsel %vm335, %v318, 0
    %339 = vmatprep.subr.bf16.mxu0 0
    %340 = vmatpush1.bf16.msra.mxu0 %v331
    %341 = vmatprep.subr.bf16.mxu0 0
    %342 = vmatpush1.bf16.msra.mxu0 %v332
    %343 = vmatprep.subr.bf16.mxu0 0
    %344 = vmatpush1.bf16.msra.mxu0 0
    %345 = vmatprep.subr.bf16.mxu0 0
    %346 = vmatpush1.bf16.msra.mxu0 0
    %347 = vmatprep.subr.bf16.mxu0 0
    %348 = vmatpush1.bf16.msra.mxu0 0
    %349 = vmatprep.subr.bf16.mxu0 0
    %350 = vmatpush1.bf16.msra.mxu0 0
    %351 = vmatprep.subr.bf16.mxu0 0
    %352 = vmatpush1.bf16.msra.mxu0 0
    %353 = vmatprep.subr.bf16.mxu0 0
    %354 = vmatpush1.bf16.msra.mxu0 0
    %355 = vmatprep.subr.bf16.mxu0 0
    %356 = vmatpush1.bf16.msra.mxu0 0
    %357 = vmatprep.subr.bf16.mxu0 0
    %358 = vmatpush1.bf16.msra.mxu0 0
    %359 = vmatprep.subr.bf16.mxu0 0
    %360 = vmatpush1.bf16.msra.mxu0 0
    %361 = vmatprep.subr.bf16.mxu0 0
    %362 = vmatpush1.bf16.msra.mxu0 0
    %363 = vmatprep.subr.bf16.mxu0 0
    %364 = vmatpush1.bf16.msra.mxu0 0
    %365 = vmatprep.subr.bf16.mxu0 0
    %366 = vmatpush1.bf16.msra.mxu0 0
    %367 = vmatprep.subr.bf16.mxu0 0
    %368 = vmatpush1.bf16.msra.mxu0 0
    %369 = vmatprep.subr.bf16.mxu0 0
    %370 = vmatpush1.bf16.msra.mxu0 0
    %371 = vmatprep.mubr.bf16.mxu0 0
    %372 = vmatmul.mubr.bf16.gmra.mrb[0].mxu0 %v337
    %v373 = vpop.f32.mrb[0].mxu0
    %v374 = vadd.f32 0.0, %v373
    %v375 = vpop.f32.mrb[0].mxu0
    %v376 = vpop.f32.mrb[0].mxu0
    %v377 = vpop.f32.mrb[0].mxu0
    %378 = vdwg.mxu0
    %v379 = vmul.f32 %v374, 0.17677669
    %v380 = vmul.f32 %v379, 1.442695
    %v381 = vpow.pop %v380
    %vm382 = vcmask 64512
    %v383 = vsel %vm382, %v381, 0.0
    %384 = vadd.xlane.f32.xlu0 %v383
    %v385 = vpop.xlane.xlu0 %384
    %v386 = vrcp.pop %v385
    %v387 = vmul.f32 %v381, %v386
    %v388 = vpack.c.bf16 %v387, %v387
    %v389 = vld [vmem:[#allocation2] sm:$0xf]
    %v391 = vsel %vm382, %v388, 0
    %vm393 = vcmask 1043456
    %v395 = vsel %vm393, %v389, 0
    %397 = vmatprep.subr.bf16.mxu0 0
    %398 = vmatpush1.bf16.msra.mxu0 %v395
    %399 = vmatprep.subr.bf16.mxu0 0
    %400 = vmatpush1.bf16.msra.mxu0 0
    %401 = vmatprep.subr.bf16.mxu0 0
    %402 = vmatpush1.bf16.msra.mxu0 0
    %403 = vmatprep.subr.bf16.mxu0 0
    %404 = vmatpush1.bf16.msra.mxu0 0
    %405 = vmatprep.subr.bf16.mxu0 0
    %406 = vmatpush1.bf16.msra.mxu0 0
    %407 = vmatprep.subr.bf16.mxu0 0
    %408 = vmatpush1.bf16.msra.mxu0 0
    %409 = vmatprep.subr.bf16.mxu0 0
    %410 = vmatpush1.bf16.msra.mxu0 0
    %411 = vmatprep.subr.bf16.mxu0 0
    %412 = vmatpush1.bf16.msra.mxu0 0
    %413 = vmatprep.subr.bf16.mxu0 0
    %414 = vmatpush1.bf16.msra.mxu0 0
    %415 = vmatprep.subr.bf16.mxu0 0
    %416 = vmatpush1.bf16.msra.mxu0 0
    %417 = vmatprep.subr.bf16.mxu0 0
    %418 = vmatpush1.bf16.msra.mxu0 0
    %419 = vmatprep.subr.bf16.mxu0 0
    %420 = vmatpush1.bf16.msra.mxu0 0
    %421 = vmatprep.subr.bf16.mxu0 0
    %422 = vmatpush1.bf16.msra.mxu0 0
    %423 = vmatprep.subr.bf16.mxu0 0
    %424 = vmatpush1.bf16.msra.mxu0 0
    %425 = vmatprep.subr.bf16.mxu0 0
    %426 = vmatpush1.bf16.msra.mxu0 0
    %427 = vmatprep.subr.bf16.mxu0 0
    %428 = vmatpush1.bf16.msra.mxu0 0
    %429 = vmatprep.mubr.bf16.mxu0 0
    %430 = vmatmul.mubr.bf16.gmra.mrb[0].mxu0 %v391
    %v431 = vpop.f32.mrb[0].mxu0
    %v432 = vadd.f32 0.0, %v431
    %v433 = vpop.f32.mrb[0].mxu0
    %v434 = vpop.f32.mrb[0].mxu0
    %v435 = vpop.f32.mrb[0].mxu0
    %436 = vdwg.mxu0
    %v437 = vpack.c.bf16 %v432, %v432
    %v438 = vld [vmem:[%s6] sm:$0xf]
    %v439 = vld [vmem:[%s6 + $0x4] sm:$0xf]
    %v440 = vld [vmem:[%s6 + $0x8] sm:$0xf]
    %v441 = vld [vmem:[%s6 + $0xc] sm:$0xf]
    %v442 = vld [vmem:[#allocation4] sm:$0x1]
    %v444 = vlaneseq
    %v445 = vshrl.u32 %v444, 7
    %v446 = vsub.s32 0, %v445
    %v447 = vrot.slane %v442, %v446
    %v453 = vunpack.c.l.b16 %v438
    %v454 = vunpack.c.l.b16 %v439
    %v455 = vunpack.c.l.b16 %v440
    %v456 = vunpack.c.l.b16 %v441
    %v457 = vpack.c.b16 %v454, %v453
    %v458 = vpack.c.b16 %v456, %v455
    %v462 = vsel %vm335, %v437, 0
    %464 = vmatprep.subr.bf16.mxu0 0
    %465 = vmatpush1.bf16.msra.mxu0 %v457
    %466 = vmatprep.subr.bf16.mxu0 0
    %467 = vmatpush1.bf16.msra.mxu0 %v458
    %468 = vmatprep.subr.bf16.mxu0 0
    %469 = vmatpush1.bf16.msra.mxu0 0
    %470 = vmatprep.subr.bf16.mxu0 0
    %471 = vmatpush1.bf16.msra.mxu0 0
    %472 = vmatprep.subr.bf16.mxu0 0
    %473 = vmatpush1.bf16.msra.mxu0 0
    %474 = vmatprep.subr.bf16.mxu0 0
    %475 = vmatpush1.bf16.msra.mxu0 0
    %476 = vmatprep.subr.bf16.mxu0 0
    %477 = vmatpush1.bf16.msra.mxu0 0
    %478 = vmatprep.subr.bf16.mxu0 0
    %479 = vmatpush1.bf16.msra.mxu0 0
    %480 = vmatprep.subr.bf16.mxu0 0
    %481 = vmatpush1.bf16.msra.mxu0 0
    %482 = vmatprep.subr.bf16.mxu0 0
    %483 = vmatpush1.bf16.msra.mxu0 0
    %484 = vmatprep.subr.bf16.mxu0 0
    %485 = vmatpush1.bf16.msra.mxu0 0
    %486 = vmatprep.subr.bf16.mxu0 0
    %487 = vmatpush1.bf16.msra.mxu0 0
    %488 = vmatprep.subr.bf16.mxu0 0
    %489 = vmatpush1.bf16.msra.mxu0 0
    %490 = vmatprep.subr.bf16.mxu0 0
    %491 = vmatpush1.bf16.msra.mxu0 0
    %492 = vmatprep.subr.bf16.mxu0 0
    %493 = vmatpush1.bf16.msra.mxu0 0
    %494 = vmatprep.subr.bf16.mxu0 0
    %495 = vmatpush1.bf16.msra.mxu0 0
    %496 = vmatprep.mubr.bf16.mxu0 0
    %497 = vmatmul.mubr.bf16.gmra.mrb[0].mxu0 %v462
    %v498 = vpop.f32.mrb[0].mxu0
    %v499 = vadd.f32 %v447, %v498
    %v500 = vpop.f32.mrb[0].mxu0
    %v501 = vpop.f32.mrb[0].mxu0
    %v502 = vpop.f32.mrb[0].mxu0
    %503 = vdwg.mxu0
    %505 = vrot.lane.b32.xlu0 %v499, 32
    %v506 = vpop.permute.xlu0 %505
    %v508 = vadd.f32 %v312, %v506
    %v509 = vmax.f32 %v508, 0.0
    %v510 = vpack.c.bf16 %v509, %v509
    %v511 = vld [vmem:[#allocation6] sm:$0xf]
    %v512 = vld [vmem:[#allocation6 + $0x4] sm:$0xf]
    %v513 = vld [vmem:[#allocation6 + $0x8] sm:$0xf]
    %v514 = vld [vmem:[#allocation6 + $0xc] sm:$0xf]
    %v515 = vld [vmem:[#allocation6 + $0x10] sm:$0xf]
    %v516 = vld [vmem:[#allocation6 + $0x14] sm:$0xf]
    %v517 = vld [vmem:[#allocation6 + $0x18] sm:$0xf]
    %v518 = vld [vmem:[#allocation6 + $0x1c] sm:$0xf]
    %v519 = vld [vmem:[#allocation7] sm:$0x1]
    %v521 = vlaneseq
    %v522 = vshrl.u32 %v521, 7
    %v523 = vsub.s32 0, %v522
    %v524 = vrot.slane %v519, %v523
    %527 = vrot.lane.b32.xlu0 %v510, 96
    %v528 = vpop.permute.xlu0 %527
    %v537 = vunpack.c.l.b16 %v511
    %v538 = vunpack.c.l.b16 %v512
    %v539 = vunpack.c.l.b16 %v513
    %v540 = vunpack.c.l.b16 %v514
    %v541 = vunpack.c.l.b16 %v515
    %v542 = vunpack.c.l.b16 %v516
    %v543 = vunpack.c.l.b16 %v517
    %v544 = vunpack.c.l.b16 %v518
    %v545 = vpack.c.b16 %v538, %v537
    %v546 = vpack.c.b16 %v540, %v539
    %v547 = vpack.c.b16 %v542, %v541
    %v548 = vpack.c.b16 %v544, %v543
    %vm553 = vcmask 523264
    %v555 = vsel %vm553, %v528, 0
    %557 = vmatprep.subr.bf16.mxu0 0
    %558 = vmatpush1.bf16.msra.mxu0 %v545
    %559 = vmatprep.subr.bf16.mxu0 0
    %560 = vmatpush1.bf16.msra.mxu0 %v546
    %561 = vmatprep.subr.bf16.mxu0 0
    %562 = vmatpush1.bf16.msra.mxu0 %v547
    %563 = vmatprep.subr.bf16.mxu0 0
    %564 = vmatpush1.bf16.msra.mxu0 %v548
    %565 = vmatprep.subr.bf16.mxu0 0
    %566 = vmatpush1.bf16.msra.mxu0 0
    %567 = vmatprep.subr.bf16.mxu0 0
    %568 = vmatpush1.bf16.msra.mxu0 0
    %569 = vmatprep.subr.bf16.mxu0 0
    %570 = vmatpush1.bf16.msra.mxu0 0
    %571 = vmatprep.subr.bf16.mxu0 0
    %572 = vmatpush1.bf16.msra.mxu0 0
    %573 = vmatprep.subr.bf16.mxu0 0
    %574 = vmatpush1.bf16.msra.mxu0 0
    %575 = vmatprep.subr.bf16.mxu0 0
    %576 = vmatpush1.bf16.msra.mxu0 0
    %577 = vmatprep.subr.bf16.mxu0 0
    %578 = vmatpush1.bf16.msra.mxu0 0
    %579 = vmatprep.subr.bf16.mxu0 0
    %580 = vmatpush1.bf16.msra.mxu0 0
    %581 = vmatprep.subr.bf16.mxu0 0
    %582 = vmatpush1.bf16.msra.mxu0 0
    %583 = vmatprep.subr.bf16.mxu0 0
    %584 = vmatpush1.bf16.msra.mxu0 0
    %585 = vmatprep.subr.bf16.mxu0 0
    %586 = vmatpush1.bf16.msra.mxu0 0
    %587 = vmatprep.subr.bf16.mxu0 0
    %588 = vmatpush1.bf16.msra.mxu0 0
    %589 = vmatprep.mubr.bf16.mxu0 0
    %590 = vmatmul.mubr.bf16.gmra.mrb[0].mxu0 %v555
    %v591 = vpop.f32.mrb[0].mxu0
    %v592 = vadd.f32 %v524, %v591
    %v593 = vpop.f32.mrb[0].mxu0
    %v594 = vpop.f32.mrb[0].mxu0
    %v595 = vpop.f32.mrb[0].mxu0
    %596 = vdwg.mxu0
    %597 = vst [vmem:[%s14] sm:$0xff] %v592
    %v598 = vmul.f32 %v592, 0.5
    %v599 = vmul.f32 %v598, 1.442695
    %v600 = vpow.pop %v599
    %v601 = vld [vmem:[%s1] sm:$0xff]
    %603 = vrot.lane.b32.xlu0 %v601, 16
    %v604 = vpop.permute.xlu0 %603
    %v606 = vmul.f32 %v600, %v604
    %608 = vrot.lane.b32.xlu0 %v606, 112
    %v609 = vpop.permute.xlu0 %608
    %v611 = vadd.f32 %v592, %v609
    %v612 = vpack.c.bf16 %v611, %v611
    %v613 = vld [vmem:[#allocation9] sm:$0xf]
    %v614 = vld [vmem:[#allocation9 + $0x4] sm:$0xf]
    %v617 = vunpack.c.l.b16 %v613
    %v618 = vunpack.c.l.b16 %v614
    %v619 = vpack.c.b16 %v618, %v617
    %621 = vrot.lane.b32.xlu0 %v499, 64
    %v622 = vpop.permute.xlu0 %621
    %vm624 = vcmask 130048
    %v626 = vsel %vm624, %v612, 0
    %628 = vmatprep.subr.bf16.mxu0 0
    %629 = vmatpush1.bf16.msra.mxu0 %v619
    %630 = vmatprep.subr.bf16.mxu0 0
    %631 = vmatpush1.bf16.msra.mxu0 0
    %632 = vmatprep.subr.bf16.mxu0 0
    %633 = vmatpush1.bf16.msra.mxu0 0
    %634 = vmatprep.subr.bf16.mxu0 0
    %635 = vmatpush1.bf16.msra.mxu0 0
    %636 = vmatprep.subr.bf16.mxu0 0
    %637 = vmatpush1.bf16.msra.mxu0 0
    %638 = vmatprep.subr.bf16.mxu0 0
    %639 = vmatpush1.bf16.msra.mxu0 0
    %640 = vmatprep.subr.bf16.mxu0 0
    %641 = vmatpush1.bf16.msra.mxu0 0
    %642 = vmatprep.subr.bf16.mxu0 0
    %643 = vmatpush1.bf16.msra.mxu0 0
    %644 = vmatprep.subr.bf16.mxu0 0
    %645 = vmatpush1.bf16.msra.mxu0 0
    %646 = vmatprep.subr.bf16.mxu0 0
    %647 = vmatpush1.bf16.msra.mxu0 0
    %648 = vmatprep.subr.bf16.mxu0 0
    %649 = vmatpush1.bf16.msra.mxu0 0
    %650 = vmatprep.subr.bf16.mxu0 0
    %651 = vmatpush1.bf16.msra.mxu0 0
    %652 = vmatprep.subr.bf16.mxu0 0
    %653 = vmatpush1.bf16.msra.mxu0 0
    %654 = vmatprep.subr.bf16.mxu0 0
    %655 = vmatpush1.bf16.msra.mxu0 0
    %656 = vmatprep.subr.bf16.mxu0 0
    %657 = vmatpush1.bf16.msra.mxu0 0
    %658 = vmatprep.subr.bf16.mxu0 0
    %659 = vmatpush1.bf16.msra.mxu0 0
    %660 = vmatprep.mubr.bf16.mxu0 0
    %661 = vmatmul.mubr.bf16.gmra.mrb[0].mxu0 %v626
    %v662 = vpop.f32.mrb[0].mxu0
    %v663 = vadd.f32 %v622, %v662
    %v664 = vpop.f32.mrb[0].mxu0
    %v665 = vpop.f32.mrb[0].mxu0
    %v666 = vpop.f32.mrb[0].mxu0
    %667 = vdwg.mxu0
    %v668 = vtanh.pop %v663
    %v669 = vpack.c.bf16 %v668, %v668
    %v670 = vld [vmem:[#allocation10] sm:$0xff]
    %v671 = vld [vmem:[#allocation10 + $0x8] sm:$0xff]
    %v672 = vld [vmem:[#allocation10 + $0x10] sm:$0xff]
    %v673 = vld [vmem:[#allocation10 + $0x18] sm:$0xff]
    %v674 = vld [vmem:[#allocation10 + $0x20] sm:$0xff]
    %v675 = vld [vmem:[#allocation10 + $0x28] sm:$0xff]
    %v676 = vld [vmem:[#allocation10 + $0x30] sm:$0xff]
    %v677 = vld [vmem:[#allocation10 + $0x38] sm:$0xff]
    %v678 = vld [vmem:[#allocation12] sm:$0x3]
    %v680 = vlaneseq
    %v681 = vshrl.u32 %v680, 7
    %v682 = vsub.s32 0, %v681
    %v683 = vrot.slane %v678, %v682
    %v684 = vlaneseq
    %v685 = vshrl.u32 %v684, 7
    %v686 = vsub.s32 1, %v685
    %v687 = vrot.slane %v678, %v686
    %v698 = vunpack.c.l.b16 %v670
    %v699 = vunpack.c.h.b16 %v670
    %v700 = vunpack.c.l.b16 %v671
    %v701 = vunpack.c.h.b16 %v671
    %v702 = vunpack.c.l.b16 %v672
    %v703 = vunpack.c.h.b16 %v672
    %v704 = vunpack.c.l.b16 %v673
    %v705 = vunpack.c.h.b16 %v673
    %v706 = vunpack.c.l.b16 %v674
    %v707 = vunpack.c.h.b16 %v674
    %v708 = vunpack.c.l.b16 %v675
    %v709 = vunpack.c.h.b16 %v675
    %v710 = vunpack.c.l.b16 %v676
    %v711 = vunpack.c.h.b16 %v676
    %v712 = vunpack.c.l.b16 %v677
    %v713 = vunpack.c.h.b16 %v677
    %v714 = vpack.c.b16 %v700, %v698
    %v715 = vpack.c.b16 %v701, %v699
    %v716 = vpack.c.b16 %v704, %v702
    %v717 = vpack.c.b16 %v705, %v703
    %v718 = vpack.c.b16 %v708, %v706
    %v719 = vpack.c.b16 %v709, %v707
    %v720 = vpack.c.b16 %v712, %v710
    %v721 = vpack.c.b16 %v713, %v711
    %v731 = vsel %vm553, %v669, 0
    %733 = vmatprep.subr.bf16.mxu0 %v715
    %734 = vmatpush1.bf16.msra.mxu0 %v714
    %735 = vmatprep.subr.bf16.mxu0 %v717
    %736 = vmatpush1.bf16.msra.mxu0 %v716
    %737 = vmatprep.subr.bf16.mxu0 %v719
    %738 = vmatpush1.bf16.msra.mxu0 %v718
    %739 = vmatprep.subr.bf16.mxu0 %v721
    %740 = vmatpush1.bf16.msra.mxu0 %v720
    %741 = vmatprep.subr.bf16.mxu0 0
    %742 = vmatpush1.bf16.msra.mxu0 0
    %743 = vmatprep.subr.bf16.mxu0 0
    %744 = vmatpush1.bf16.msra.mxu0 0
    %745 = vmatprep.subr.bf16.mxu0 0
    %746 = vmatpush1.bf16.msra.mxu0 0
    %747 = vmatprep.subr.bf16.mxu0 0
    %748 = vmatpush1.bf16.msra.mxu0 0
    %749 = vmatprep.subr.bf16.mxu0 0
    %750 = vmatpush1.bf16.msra.mxu0 0
    %751 = vmatprep.subr.bf16.mxu0 0
    %752 = vmatpush1.bf16.msra.mxu0 0
    %753 = vmatprep.subr.bf16.mxu0 0
    %754 = vmatpush1.bf16.msra.mxu0 0
    %755 = vmatprep.subr.bf16.mxu0 0
    %756 = vmatpush1.bf16.msra.mxu0 0
    %757 = vmatprep.subr.bf16.mxu0 0
    %758 = vmatpush1.bf16.msra.mxu0 0
    %759 = vmatprep.subr.bf16.mxu0 0
    %760 = vmatpush1.bf16.msra.mxu0 0
    %761 = vmatprep.subr.bf16.mxu0 0
    %762 = vmatpush1.bf16.msra.mxu0 0
    %763 = vmatprep.subr.bf16.mxu0 0
    %764 = vmatpush1.bf16.msra.mxu0 0
    %765 = vmatprep.mubr.bf16.mxu0 0
    %766 = vmatmul.mubr.bf16.gmra.mrb[0].mxu0 %v731
    %v767 = vpop.f32.mrb[0].mxu0
    %v768 = vadd.f32 %v683, %v767
    %v769 = vpop.f32.mrb[0].mxu0
    %v770 = vadd.f32 %v687, %v769
    %v771 = vpop.f32.mrb[0].mxu0
    %v772 = vpop.f32.mrb[0].mxu0
    %773 = vdwg.mxu0
    %774 = vst [vmem:[%s13] sm:$0xff] %v768
    %775 = vst [vmem:[%s13 + $0x8] sm:$0xff] %v770
    // Predicated region
    $region82: #{cvae_forward.1} parent=1 // pred_check
      _
    $region83: #{cvae_forward.1} parent=1 // pred_check_branch
      %777 = sbr.rel (0) target = $region85
    $region84: #{cvae_forward.1} parent=1 // pred_region
      _
    $region85: #{cvae_forward.1} parent=1 // pred_fallthru
      _
    // Predicated region
    $region86: #{cvae_forward.1} parent=1 // pred_check
      _
    $region87: #{cvae_forward.1} parent=1 // pred_check_branch
      %779 = sbr.rel (0) target = $region89
    $region88: #{cvae_forward.1} parent=1 // pred_region
      _
    $region89: #{cvae_forward.1} parent=1 // pred_fallthru
      _
    // Predicated region
    $region90: #{cvae_forward.1} parent=1 // pred_check
      _
    $region91: #{cvae_forward.1} parent=1 // pred_check_branch
      %781 = sbr.rel (0) target = $region93
    $region92: #{cvae_forward.1} parent=1 // pred_region
      _
    $region93: #{cvae_forward.1} parent=1 // pred_fallthru
      _
    // Predicated region
    $region94: #{cvae_forward.1} parent=1 // pred_check
      _
    $region95: #{cvae_forward.1} parent=1 // pred_check_branch
      %783 = sbr.rel (0) target = $region97
    $region96: #{cvae_forward.1} parent=1 // pred_region
      _
    $region97: #{cvae_forward.1} parent=1 // pred_fallthru
      _
    %784 = vsyncpa [#allocation3], 1
    %785 = vsyncpa [#allocation5], 1
    %786 = vsyncpa [#allocation8], 1
    %787 = vsyncpa [#allocation11], 1

</llo_original>
